<compile_context>
chip_gen: v6e
topology: v6e:2x2x1
jax: 0.10.0
libtpu: 0.0.40
codegen_flags: <defaults>
</compile_context>

<pallas_src>
import jax
import jax.numpy as jnp
from jax.experimental import pallas as pl
from jax.experimental.pallas import tpu as pltpu


# ---------------------------------------------------------------------------
# tiling helper
# ---------------------------------------------------------------------------
def _pick_tile(dim, cap, align):
    """Largest tile <= cap that divides `dim` and is a multiple of `align`.
    Falls back to the full dimension (a full-extent block is always legal)."""
    if dim <= cap:
        return dim
    t = (cap // align) * align
    while t >= align:
        if dim % t == 0:
            return t
        t -= align
    # TODO(synk): pad the sequence instead of falling back for awkward lengths.
    return dim


# ---------------------------------------------------------------------------
# tiled linear (x @ w + b) kernel
# ---------------------------------------------------------------------------
def _linear_kernel(x_ref, w_ref, b_ref, o_ref, acc_ref):
    @pl.when(pl.program_id(2) == 0)
    def _():
        acc_ref[...] = jnp.zeros_like(acc_ref)

    acc_ref[...] += jnp.dot(
        x_ref[...].astype(jnp.bfloat16),
        w_ref[...].astype(jnp.bfloat16),
        preferred_element_type=jnp.float32,
    )

    @pl.when(pl.program_id(2) == pl.num_programs(2) - 1)
    def _():
        o_ref[...] = (acc_ref[...] + b_ref[...].astype(jnp.float32)).astype(o_ref.dtype)


def linear(x, w, b, out_dtype=jnp.float32, tm_cap=512, tn_cap=512, tk_cap=512):
    M, K = x.shape
    K2, N = w.shape
    assert K == K2
    align_m = 16 if out_dtype == jnp.bfloat16 else 8
    tm = _pick_tile(M, tm_cap, align_m)
    tn = _pick_tile(N, tn_cap, 128)
    tk = _pick_tile(K, tk_cap, 128)
    b2 = b.reshape(1, N)
    return pl.pallas_call(
        _linear_kernel,
        out_shape=jax.ShapeDtypeStruct((M, N), out_dtype),
        grid=(M // tm, N // tn, K // tk),
        in_specs=[
            pl.BlockSpec((tm, tk), lambda i, j, k: (i, k)),
            pl.BlockSpec((tk, tn), lambda i, j, k: (k, j)),
            pl.BlockSpec((1, tn), lambda i, j, k: (0, j)),
        ],
        out_specs=pl.BlockSpec((tm, tn), lambda i, j, k: (i, j)),
        scratch_shapes=[pltpu.VMEM((tm, tn), jnp.float32)],
        compiler_params=pltpu.CompilerParams(
            dimension_semantics=("parallel", "parallel", "arbitrary"),
            vmem_limit_bytes=48 * 1024 * 1024,
        ),
    )(x, w, b2)


# ---------------------------------------------------------------------------
# attention + streaming neuron-impacts kernel
# ---------------------------------------------------------------------------
def _attn_impacts_kernel(
    li_tab, si_tab,                                   # scalar-prefetch (SMEM)
    q_ref, k_ref, v_ref,                              # inputs (VMEM tiles)
    o_ref, imp_ref,                                   # outputs
    m_sc, z_sc, p2_sc, acc_sc, md_sc, zd_sc, pd2_sc, cross_sc, imp_sc,  # scratch
):
    pidx = pl.program_id(2)
    npair = pl.num_programs(2)
    li = li_tab[pidx]
    si = si_tab[pidx]
    tl = q_ref.shape[2]
    ts = k_ref.shape[2]
    d = q_ref.shape[3]
    last_si = (li * tl + (tl - 1)) // ts              # last kv tile for this q tile

    # ---- (re)initialize per-(b, h, q-tile) running statistics at first kv tile ----
    @pl.when(si == 0)
    def _():
        m_sc[...] = jnp.full_like(m_sc, -1e30)
        z_sc[...] = jnp.zeros_like(z_sc)
        p2_sc[...] = jnp.zeros_like(p2_sc)
        acc_sc[...] = jnp.zeros_like(acc_sc)
        md_sc[...] = jnp.full_like(md_sc, -1e30)
        zd_sc[...] = jnp.zeros_like(zd_sc)
        pd2_sc[...] = jnp.zeros_like(pd2_sc)
        cross_sc[...] = jnp.zeros_like(cross_sc)

    # ---- initialize per-(b, h) impacts accumulator ----
    @pl.when(pidx == 0)
    def _():
        imp_sc[...] = jnp.zeros_like(imp_sc)

    q_bf = q_ref[0, 0]                                # (tl, d) bf16, roped + 1/sqrt(d)
    k_bf = k_ref[0, 0]                                # (ts, d) bf16, roped
    q = q_bf.astype(jnp.float32)
    k = k_bf.astype(jnp.float32)

    # Logits on the MXU (bf16 operands, f32 accumulation); scale already folded in q.
    s = jax.lax.dot_general(q_bf, k_bf, (((1,), (1,)), ((), ())),
                            preferred_element_type=jnp.float32)   # (tl, ts)
    row = li * tl + jax.lax.broadcasted_iota(jnp.int32, (tl, ts), 0)
    col = si * ts + jax.lax.broadcasted_iota(jnp.int32, (tl, ts), 1)
    s = jnp.where(col <= row, s, -1e30)

    # ---- main attention path: online softmax ----
    m_prev = m_sc[...]                                # (tl, 1)
    m_new = jnp.maximum(m_prev, jnp.max(s, axis=-1, keepdims=True))
    a = jnp.exp(m_prev - m_new)                       # (tl, 1)
    p = jnp.exp(s - m_new)                            # (tl, ts); 0 on masked entries
    z_sc[...] = a * z_sc[...] + jnp.sum(p, axis=-1, keepdims=True)
    p2_sc[...] = (a * a) * p2_sc[...] + jnp.sum(p * p, axis=-1, keepdims=True)
    acc_sc[...] = a * acc_sc[...] + jnp.dot(
        p.astype(jnp.bfloat16), v_ref[0, 0], preferred_element_type=jnp.float32)
    m_sc[...] = m_new

    # ---- neuron impacts: register-resident per-kv-row accumulation ----
    # Running bound md >= max_j (s - delta) keeps every exp argument <= 0.
    kmax = jnp.max(jnp.abs(k), axis=0, keepdims=True)            # (1, d)
    md_prev = md_sc[...]                                         # (tl, d)
    md_new = jnp.maximum(md_prev, m_new + jnp.abs(q) * kmax)     # (tl, d)
    ad = jnp.exp(md_prev - md_new)                               # (tl, d)
    mg = m_new - md_new                                          # (tl, d), <= 0
    nk = -k                                                      # (ts, d)

    s_zd = jnp.zeros((tl, d), jnp.float32)
    s_cross = jnp.zeros((tl, d), jnp.float32)
    s_pd2 = jnp.zeros((tl, d), jnp.float32)
    for j in range(ts):                                          # static unroll
        e = jnp.exp(q * nk[j:j + 1, :] + mg)                     # exp(-delta + m - md)
        pj = p[:, j:j + 1]                                       # (tl, 1)
        t = pj * e                                               # exp(s - delta - md)
        s_zd = s_zd + t
        s_cross = s_cross + pj * t
        s_pd2 = s_pd2 + t * t

    zd_sc[...] = ad * zd_sc[...] + s_zd
    cross_sc[...] = (a * ad) * cross_sc[...] + s_cross
    pd2_sc[...] = (ad * ad) * pd2_sc[...] + s_pd2
    md_sc[...] = md_new

    # ---- finalize this (b, h, q-tile): attention output + impacts contribution ----
    @pl.when(si == last_si)
    def _():
        o_ref[...] = (acc_sc[...] * pl.reciprocal(z_sc[...], approx=True)
                      )[None, None].astype(o_ref.dtype)
        inv_z = 1.0 / z_sc[...]                                  # exact: near-cancellation
        inv_zd = 1.0 / zd_sc[...]
        # sum_j (attn - attn_d)^2 = P2/Z^2 - 2*CROSS/(Z*Zd) + PD2/Zd^2
        term = (p2_sc[...] * (inv_z * inv_z)
                - 2.0 * cross_sc[...] * (inv_z * inv_zd)
                + pd2_sc[...] * (inv_zd * inv_zd))               # (tl, d)
        imp_sc[...] += jnp.sum(term, axis=0, keepdims=True)      # (1, d)

    # ---- very last pair of this (b, h): write impacts ----
    @pl.when(pidx == npair - 1)
    def _():
        imp_ref[...] = jnp.sqrt(jnp.maximum(imp_sc[...], 0.0))[None, None]


# ---------------------------------------------------------------------------
# Wrapper (plain-JAX glue: fused weights, rope, pair table, reshapes)
# ---------------------------------------------------------------------------
def qwen2_sdpa_attention_nd(hidden_states, params, num_heads, num_kv_heads,
                            rope_theta=10000.0, tl_cap=64, ts_cap=64):
    bsz, q_len, hidden = hidden_states.shape
    head_dim = hidden // num_heads
    kv_dim = num_kv_heads * head_dim
    n_rep = num_heads // num_kv_heads

    # ---- fused q|k|v projection: one pass over the activations ----
    w_qkv = jnp.concatenate(
        [params["wq"], params["wk"], params["wv"]], axis=1).astype(jnp.bfloat16)
    b_qkv = jnp.concatenate(
        [params["bq"], params["bk"], params["bv"]]).astype(jnp.float32)
    x2d = hidden_states.reshape(bsz * q_len, hidden).astype(jnp.bfloat16)
    qkv = linear(x2d, w_qkv, b_qkv, out_dtype=jnp.float32)

    q = qkv[:, :hidden].reshape(bsz, q_len, num_heads, head_dim).transpose(0, 2, 1, 3)
    k = qkv[:, hidden:hidden + kv_dim].reshape(
        bsz, q_len, num_kv_heads, head_dim).transpose(0, 2, 1, 3)
    v = qkv[:, hidden + kv_dim:].reshape(
        bsz, q_len, num_kv_heads, head_dim).transpose(0, 2, 1, 3)
    # TODO(synk): the O(L*hidden) head-split transposes stay in XLA (fused with rope);
    # reading the fused qkv buffer directly via index_maps needs head_dim % 128 == 0.

    # ---- rotary embedding applied once (O(L)), 1/sqrt(d) folded into q ----
    # TODO(synk): past_key_value / explicit attention_mask paths not implemented
    # (the module is exercised with is_causal=True, position_ids = arange, no cache).
    inv_freq = 1.0 / (rope_theta ** (jnp.arange(0, head_dim, 2, dtype=jnp.float32)
                                     / head_dim))
    pos = jnp.arange(q_len, dtype=jnp.float32)
    freqs = pos[:, None] * inv_freq[None, :]
    emb = jnp.concatenate([freqs, freqs], axis=-1)               # (L, d)
    cos = jnp.cos(emb)[None, None]
    sin = jnp.sin(emb)[None, None]
    half = head_dim // 2

    def rope(x):
        rot = jnp.concatenate([-x[..., half:], x[..., :half]], axis=-1)
        return x * cos + rot * sin

    scale = 1.0 / head_dim ** 0.5
    q_r = (rope(q) * scale).astype(jnp.bfloat16)
    k_r = rope(k).astype(jnp.bfloat16)
    v_b = v.astype(jnp.bfloat16)

    # ---- tiles + lower-triangular (q-tile, kv-tile) pair table ----
    tl = _pick_tile(q_len, tl_cap, 8)
    ts = _pick_tile(q_len, ts_cap, 8)
    assert q_len % tl == 0 and q_len % ts == 0
    num_l = q_len // tl
    li_list, si_list = [], []
    for li in range(num_l):
        for si in range((li * tl + tl - 1) // ts + 1):
            li_list.append(li)
            si_list.append(si)
    li_tab = jnp.asarray(li_list, dtype=jnp.int32)
    si_tab = jnp.asarray(si_list, dtype=jnp.int32)
    num_pairs = len(li_list)

    grid_spec = pltpu.PrefetchScalarGridSpec(
        num_scalar_prefetch=2,
        grid=(bsz, num_heads, num_pairs),
        in_specs=[
            pl.BlockSpec((1, 1, tl, head_dim),
                         lambda b, h, p, lt, st: (b, h, lt[p], 0)),
            pl.BlockSpec((1, 1, ts, head_dim),
                         lambda b, h, p, lt, st: (b, h // n_rep, st[p], 0)),
            pl.BlockSpec((1, 1, ts, head_dim),
                         lambda b, h, p, lt, st: (b, h // n_rep, st[p], 0)),
        ],
        out_specs=(
            pl.BlockSpec((1, 1, tl, head_dim),
                         lambda b, h, p, lt, st: (b, h, lt[p], 0)),
            pl.BlockSpec((1, 1, 1, head_dim),
                         lambda b, h, p, lt, st: (b, h, 0, 0)),
        ),
        scratch_shapes=[
            pltpu.VMEM((tl, 1), jnp.float32),          # running max (attn)
            pltpu.VMEM((tl, 1), jnp.float32),          # running sum p
            pltpu.VMEM((tl, 1), jnp.float32),          # running sum p^2
            pltpu.VMEM((tl, head_dim), jnp.float32),   # running p @ v
            pltpu.VMEM((tl, head_dim), jnp.float32),   # running max bound (impacts)
            pltpu.VMEM((tl, head_dim), jnp.float32),   # running sum pd
            pltpu.VMEM((tl, head_dim), jnp.float32),   # running sum pd^2
            pltpu.VMEM((tl, head_dim), jnp.float32),   # running sum p*pd
            pltpu.VMEM((1, head_dim), jnp.float32),    # per-(b,h) impacts^2
        ],
    )

    out, imp = pl.pallas_call(
        _attn_impacts_kernel,
        out_shape=(
            jax.ShapeDtypeStruct((bsz, num_heads, q_len, head_dim), jnp.bfloat16),
            jax.ShapeDtypeStruct((bsz, num_heads, 1, head_dim), jnp.float32),
        ),
        grid_spec=grid_spec,
        compiler_params=pltpu.CompilerParams(
            dimension_semantics=("parallel", "parallel", "arbitrary"),
            vmem_limit_bytes=48 * 1024 * 1024,
        ),
    )(li_tab, si_tab, q_r, k_r, v_b)

    # ---- output projection ----
    attn2d = out.transpose(0, 2, 1, 3).reshape(bsz * q_len, hidden)
    attn_out = linear(attn2d, params["wo"].astype(jnp.bfloat16),
                      params["bo"].astype(jnp.float32), out_dtype=jnp.float32)
    attn_out = attn_out.reshape(bsz, q_len, hidden)

    impacts = imp.reshape(bsz, num_heads, head_dim)
    # Torch module returns (attn_output, None, past_key_value) and stashes the
    # impacts on q_proj/k_proj; we return them explicitly.
    return attn_out, impacts


# ---------------------------------------------------------------------------
# Pure-JAX f32 reference (mirrors the torch forward; dropout = 0, no kv cache)
# ---------------------------------------------------------------------------
def reference(hidden_states, params, num_heads, num_kv_heads, rope_theta=10000.0):
    bsz, L, hidden = hidden_states.shape
    d = hidden // num_heads
    n_rep = num_heads // num_kv_heads
    x = hidden_states.astype(jnp.float32)
    q = x @ params["wq"] + params["bq"]
    k = x @ params["wk"] + params["bk"]
    v = x @ params["wv"] + params["bv"]
    q = q.reshape(bsz, L, num_heads, d).transpose(0, 2, 1, 3)
    k = k.reshape(bsz, L, num_kv_heads, d).transpose(0, 2, 1, 3)
    v = v.reshape(bsz, L, num_kv_heads, d).transpose(0, 2, 1, 3)

    inv_freq = 1.0 / (rope_theta ** (jnp.arange(0, d, 2, dtype=jnp.float32) / d))
    pos = jnp.arange(L, dtype=jnp.float32)
    freqs = pos[:, None] * inv_freq[None, :]
    emb = jnp.concatenate([freqs, freqs], axis=-1)
    cos = jnp.cos(emb)[None, None]
    sin = jnp.sin(emb)[None, None]

    def rot_half(t):
        t1, t2 = t[..., : d // 2], t[..., d // 2:]
        return jnp.concatenate([-t2, t1], axis=-1)

    q = q * cos + rot_half(q) * sin
    k = k * cos + rot_half(k) * sin
    k = jnp.repeat(k, n_rep, axis=1)
    v = jnp.repeat(v, n_rep, axis=1)

    scale = 1.0 / d ** 0.5
    s = jnp.einsum("bhld,bhsd->bhls", q, k)
    mask = jnp.where(jnp.tril(jnp.ones((L, L), dtype=bool)), 0.0, -jnp.inf)
    attn = jax.nn.softmax(s * scale + mask, axis=-1)
    out = jnp.einsum("bhls,bhsd->bhld", attn, v)
    out = out.transpose(0, 2, 1, 3).reshape(bsz, L, hidden) @ params["wo"] + params["bo"]

    delta = q[..., :, None, :] * k[..., None, :, :]
    logits_d = (s[..., None] - delta) * scale + mask[None, None, :, :, None]
    attn_d = jax.nn.softmax(logits_d, axis=-2)
    imp = jnp.sqrt(jnp.sum((attn[..., None] - attn_d) ** 2, axis=(-2, -3)))
    return out, imp


# ---------------------------------------------------------------------------
if __name__ == "__main__":
    def run_case(bsz, q_len, hidden, num_heads, num_kv_heads,
                 tl_cap=64, ts_cap=64, scale_w=0.05, tol=0.05):
        head_dim = hidden // num_heads
        kv_dim = num_kv_heads * head_dim
        keys = jax.random.split(jax.random.PRNGKey(0), 8)
        params = {
            "wq": scale_w * jax.random.normal(keys[0], (hidden, hidden), jnp.float32),
            "bq": scale_w * jax.random.normal(keys[1], (hidden,), jnp.float32),
            "wk": scale_w * jax.random.normal(keys[2], (hidden, kv_dim), jnp.float32),
            "bk": scale_w * jax.random.normal(keys[3], (kv_dim,), jnp.float32),
            "wv": scale_w * jax.random.normal(keys[4], (hidden, kv_dim), jnp.float32),
            "bv": scale_w * jax.random.normal(keys[5], (kv_dim,), jnp.float32),
            "wo": scale_w * jax.random.normal(keys[6], (hidden, hidden), jnp.float32),
            "bo": jnp.zeros((hidden,), jnp.float32),  # o_proj has no bias in Qwen2
        }
        x = jax.random.normal(keys[7], (bsz, q_len, hidden), jnp.float32)

        out, imp = qwen2_sdpa_attention_nd(x, params, num_heads, num_kv_heads,
                                           tl_cap=tl_cap, ts_cap=ts_cap)
        out = jax.block_until_ready(out)
        imp = jax.block_until_ready(imp)

        ref_out, ref_imp = reference(x, params, num_heads, num_kv_heads)

        def check(name, a, b):
            err = float(jnp.max(jnp.abs(a - b)) / (jnp.max(jnp.abs(b)) + 1e-6))
            assert err < tol, f"{name} mismatch: normalized max error {err:.4f}"

        check("attn_output", out, ref_out)
        check("impacts", imp, ref_imp)

    # Small Qwen2-style config (single q/kv tile per head, GQA 4:2).
    run_case(bsz=2, q_len=8, hidden=32, num_heads=4, num_kv_heads=2)
    # Larger config exercising the pair-table grid skip, multi-tile online rescaling,
    # the GQA index_map (2:1) and the unrolled impacts inner loop.
    run_case(bsz=1, q_len=128, hidden=128, num_heads=2, num_kv_heads=1,
             tl_cap=32, ts_cap=32)

    print("KERNEL_OK")
</pallas_src>

<mosaic_0001>
module attributes {stable_mosaic.version = 11 : i64} {
  func.func @_linear_kernel(%arg0: i32, %arg1: i32, %arg2: i32, %arg3: memref<16x32xbf16, #tpu.memory_space<vmem>>, %arg4: memref<32x64xbf16, #tpu.memory_space<vmem>>, %arg5: memref<1x64xf32, #tpu.memory_space<vmem>>, %arg6: memref<16x64xf32, #tpu.memory_space<vmem>>, %arg7: memref<16x64xf32, #tpu.memory_space<vmem>>) attributes {dimension_semantics = [#tpu.dimension_semantics<parallel>, #tpu.dimension_semantics<parallel>, #tpu.dimension_semantics<arbitrary>], iteration_bounds = array<i64: 1, 1, 1>, scalar_prefetch = 0 : i64, scratch_operands = 1 : i64, tpu.core_type = #tpu.core_type<tc>, window_params = [{transform_indices = @transform_0, window_bounds = array<i64: 16, 32>}, {transform_indices = @transform_1, window_bounds = array<i64: 32, 64>}, {transform_indices = @transform_2, window_bounds = array<i64: 1, 64>}, {transform_indices = @transform_3, window_bounds = array<i64: 16, 64>}]} {
    %c0_i32 = arith.constant 0 : i32
    %0 = arith.cmpi eq, %arg2, %c0_i32 : i32
    %1 = arith.extui %0 : i1 to i32
    %c0_i32_0 = arith.constant 0 : i32
    %2 = arith.cmpi ne, %1, %c0_i32_0 : i32
    scf.if %2 {
      %cst_10 = arith.constant 0.000000e+00 : f32
      %12 = vector.broadcast %cst_10 : f32 to vector<16x64xf32>
      %c0_11 = arith.constant 0 : index
      %c0_12 = arith.constant 0 : index
      %13 = vector.load %arg7[%c0_11, %c0_12] : memref<16x64xf32, #tpu.memory_space<vmem>>, vector<16x64xf32>
      tpu.vector_store %arg7[%c0_11, %c0_12], %12 {strides = array<i32>} : memref<16x64xf32, #tpu.memory_space<vmem>>, vector<16x64xf32>,
    } else {
    }
    %c0 = arith.constant 0 : index
    %c0_1 = arith.constant 0 : index
    %3 = vector.load %arg7[%c0, %c0_1] : memref<16x64xf32, #tpu.memory_space<vmem>>, vector<16x64xf32>
    %c0_2 = arith.constant 0 : index
    %c0_3 = arith.constant 0 : index
    %4 = vector.load %arg3[%c0_2, %c0_3] : memref<16x32xbf16, #tpu.memory_space<vmem>>, vector<16x32xbf16>
    %c0_4 = arith.constant 0 : index
    %c0_5 = arith.constant 0 : index
    %5 = vector.load %arg4[%c0_4, %c0_5] : memref<32x64xbf16, #tpu.memory_space<vmem>>, vector<32x64xbf16>
    %cst = arith.constant dense<0.000000e+00> : vector<16x64xf32>
    %6 = tpu.matmul %4, %5, %cst {dimension_numbers = #tpu.dot_dimension_numbers<[1], [0], [0], [1], [0, 0, 1, 1], [], []>} : vector<16x32xbf16>, vector<32x64xbf16>, vector<16x64xf32> -> vector<16x64xf32>
    %7 = arith.addf %3, %6 : vector<16x64xf32>
    %c0_6 = arith.constant 0 : index
    %c0_7 = arith.constant 0 : index
    %8 = vector.load %arg7[%c0_6, %c0_7] : memref<16x64xf32, #tpu.memory_space<vmem>>, vector<16x64xf32>
    tpu.vector_store %arg7[%c0_6, %c0_7], %7 {strides = array<i32>} : memref<16x64xf32, #tpu.memory_space<vmem>>, vector<16x64xf32>,
    %c0_i32_8 = arith.constant 0 : i32
    %9 = arith.cmpi eq, %arg2, %c0_i32_8 : i32
    %10 = arith.extui %9 : i1 to i32
    %c0_i32_9 = arith.constant 0 : i32
    %11 = arith.cmpi ne, %10, %c0_i32_9 : i32
    scf.if %11 {
      %c0_10 = arith.constant 0 : index
      %c0_11 = arith.constant 0 : index
      %12 = vector.load %arg7[%c0_10, %c0_11] : memref<16x64xf32, #tpu.memory_space<vmem>>, vector<16x64xf32>
      %c0_12 = arith.constant 0 : index
      %c0_13 = arith.constant 0 : index
      %13 = vector.load %arg5[%c0_12, %c0_13] : memref<1x64xf32, #tpu.memory_space<vmem>>, vector<1x64xf32>
      %14 = vector.broadcast %13 : vector<1x64xf32> to vector<16x64xf32>
      %15 = arith.addf %12, %14 : vector<16x64xf32>
      %c0_14 = arith.constant 0 : index
      %c0_15 = arith.constant 0 : index
      %16 = vector.load %arg6[%c0_14, %c0_15] : memref<16x64xf32, #tpu.memory_space<vmem>>, vector<16x64xf32>
      tpu.vector_store %arg6[%c0_14, %c0_15], %15 {strides = array<i32>} : memref<16x64xf32, #tpu.memory_space<vmem>>, vector<16x64xf32>,
    } else {
    }
    return
  }
  func.func @transform_0(%arg0: i32, %arg1: i32, %arg2: i32) -> (i32, i32) {
    %c0_i32 = arith.constant 0 : i32
    return %arg0, %arg2 : i32, i32
  }
  func.func @transform_1(%arg0: i32, %arg1: i32, %arg2: i32) -> (i32, i32) {
    %c0_i32 = arith.constant 0 : i32
    return %arg2, %arg1 : i32, i32
  }
  func.func @transform_2(%arg0: i32, %arg1: i32, %arg2: i32) -> (i32, i32) {
    %c0_i32 = arith.constant 0 : i32
    %c0_i32_0 = arith.constant 0 : i32
    return %c0_i32, %arg1 : i32, i32
  }
  func.func @transform_3(%arg0: i32, %arg1: i32, %arg2: i32) -> (i32, i32) {
    %c0_i32 = arith.constant 0 : i32
    return %arg0, %arg1 : i32, i32
  }
}

</mosaic_0001>

<llo_original>
// kernel: tpu_custom_call.1
$region0: #{tpu_custom_call.1}
  #allocation0 [shape = 'u32[]', space=smem, size = 0x4, offset = 0x4, fixed_abs, tag = 'smem constant byte address 0x4 - core index']
  #allocation1 [shape = 'u32[144,128]{1,0:T(1,128)}', space=vmem, size = 0x12000, scoped, tag = 'internal scratch']
  #allocation2 [shape = 'f32[16,64]{1,0:T(8,128)}', space=vmem, size = 0x2000, scoped, tag = 'scratch operand']
  %s0 = inlined_call_operand.hbm [shape: bf16[16,32], index: 0, kind: input, shape index: {}]
  %s1 = inlined_call_operand.hbm [shape: bf16[32,64], index: 1, kind: input, shape index: {}]
  %s2 = inlined_call_operand.vmem [shape: f32[1,64], index: 2, kind: input, shape index: {}]
  %s3 = inlined_call_operand.hbm [shape: f32[16,64], index: 3, kind: output, shape index: {}]
  %s4 = sld [smem:[#allocation0]]
  $region38: #{tpu_custom_call.1} parent=0
    _
  %s6 = ssub.s32 1, %s4
  %s7 = scalar_select 0, %s6, %s4
  $region1: #{tpu_custom_call.1} parent=0
    #allocation3 [shape = 'u8[4096]{0}', space=vmem, size = 0x1000, scoped, tag = 'input window, operand 0, single buffered']
    #allocation4 [shape = 's32[1]{0}', space=sflag, size = 0x4, scoped, tag = 'scoped memory for tpu_custom_call.1']
    #allocation5 [shape = 's32[1]{0}', space=sflag, size = 0x4, scoped, tag = 'scoped memory for tpu_custom_call.1']
    #allocation6 [shape = 'u8[8192]{0}', space=vmem, size = 0x2000, scoped, tag = 'input window, operand 1, single buffered']
    #allocation7 [shape = 's32[1]{0}', space=sflag, size = 0x4, scoped, tag = 'scoped memory for tpu_custom_call.1']
    #allocation8 [shape = 'u8[8192]{0}', space=vmem, size = 0x2000, scoped, tag = 'output window, operand 0, single buffered']
    %8 = vsyncpa [#allocation4], 0
    %9 = vsyncpa [#allocation7], 0
    %10 = vsyncpa [#allocation5], 0
    // Predicated region
    $region2: #{tpu_custom_call.1} parent=1 // pred_check
      _
    $region3: #{tpu_custom_call.1} parent=1 // pred_check_branch
      %12 = sbr.rel (0) target = $region5
    $region4: #{tpu_custom_call.1} parent=1 // pred_region
      %s14 = ssub.s32 128, 128
      %15 = vsyncadd [#allocation4], %s14
      %s16 = sshll.u32 [#allocation3], 4
      %s17 = int_to_ptr.vmem [resolvable:$true] %s16
      %22 = dma.hbm_to_vmem [thread:$0]  %s0, 128, %s17, [#allocation4], 64, 64, 4
    $region5: #{tpu_custom_call.1} parent=1 // pred_fallthru
      _
    // Predicated region
    $region6: #{tpu_custom_call.1} parent=1 // pred_check
      _
    $region7: #{tpu_custom_call.1} parent=1 // pred_check_branch
      %24 = sbr.rel (0) target = $region9
    $region8: #{tpu_custom_call.1} parent=1 // pred_region
      %s26 = ssub.s32 256, 256
      %27 = vsyncadd [#allocation7], %s26
      %s28 = sshll.u32 [#allocation6], 4
      %s29 = int_to_ptr.vmem [resolvable:$true] %s28
      %34 = dma.hbm_to_vmem [thread:$0]  %s1, 256, %s29, [#allocation7], 64, 64, 4
    $region9: #{tpu_custom_call.1} parent=1 // pred_fallthru
      _
    // Predicated region
    $region10: #{tpu_custom_call.1} parent=1 // pred_check
      _
    $region11: #{tpu_custom_call.1} parent=1 // pred_check_branch
      %36 = sbr.rel (0) target = $region13
    $region12: #{tpu_custom_call.1} parent=1 // pred_region
      _
    $region13: #{tpu_custom_call.1} parent=1 // pred_fallthru
      _
    // Predicated region
    $region14: #{tpu_custom_call.1} parent=1 // pred_check
      _
    $region15: #{tpu_custom_call.1} parent=1 // pred_check_branch
      %38 = sbr.rel (0) target = $region17
    $region16: #{tpu_custom_call.1} parent=1 // pred_region
      %39 = dma.done [#allocation4], 128
    $region17: #{tpu_custom_call.1} parent=1 // pred_fallthru
      _
    // Predicated region
    $region18: #{tpu_custom_call.1} parent=1 // pred_check
      _
    $region19: #{tpu_custom_call.1} parent=1 // pred_check_branch
      %41 = sbr.rel (0) target = $region21
    $region20: #{tpu_custom_call.1} parent=1 // pred_region
      %42 = dma.done [#allocation7], 256
    $region21: #{tpu_custom_call.1} parent=1 // pred_fallthru
      _
    %p44 = scmp.eq.s32.totalorder 0, 0
    // Predicated region
    $region22: #{tpu_custom_call.1} parent=1 // pred_check
      %p45 = pneg %p44
    $region23: #{tpu_custom_call.1} parent=1 // pred_check_branch
      %47 = sbr.rel (%p45) target = $region25
    $region24: #{tpu_custom_call.1} parent=1 // pred_region
      %vm48 = vcmask 523264
      %49 = vst.msk [vmem:[#allocation2] sm:$0xff] %vm48, 0.0
      %50 = vst.msk [vmem:[#allocation2 + $0x8] sm:$0xff] %vm48, 0.0
    $region25: #{tpu_custom_call.1} parent=1 // pred_fallthru
      _
    %v51 = vld [vmem:[#allocation2] sm:$0xff]
    %v52 = vld [vmem:[#allocation2 + $0x8] sm:$0xff]
    %v53 = vld [vmem:[#allocation3] sm:$0xf]
    %v54 = vld [vmem:[#allocation3 + $0x4] sm:$0xf]
    %v55 = vld [vmem:[#allocation6] sm:$0xf]
    %v56 = vld [vmem:[#allocation6 + $0x4] sm:$0xf]
    %v57 = vld [vmem:[#allocation6 + $0x8] sm:$0xf]
    %v58 = vld [vmem:[#allocation6 + $0xc] sm:$0xf]
    %v61 = vunpack.c.l.b16 %v53
    %v62 = vunpack.c.l.b16 %v54
    %v63 = vpack.c.b16 %v62, %v61
    %v68 = vunpack.c.l.b16 %v55
    %v69 = vunpack.c.l.b16 %v56
    %v70 = vunpack.c.l.b16 %v57
    %v71 = vunpack.c.l.b16 %v58
    %v72 = vpack.c.b16 %v69, %v68
    %v73 = vpack.c.b16 %v71, %v70
    %vm76 = vcmask 261120
    %v78 = vsel %vm76, %v63, 0
    %80 = vmatprep.subr.bf16.mxu0 0
    %81 = vmatpush1.bf16.msra.mxu0 0
    %82 = vmatprep.subr.bf16.mxu0 0
    %83 = vmatpush1.bf16.msra.mxu0 0
    %84 = vmatprep.subr.bf16.mxu0 0
    %85 = vmatpush1.bf16.msra.mxu0 0
    %86 = vmatprep.subr.bf16.mxu0 0
    %87 = vmatpush1.bf16.msra.mxu0 0
    %88 = vmatprep.subr.bf16.mxu0 0
    %89 = vmatpush1.bf16.msra.mxu0 0
    %90 = vmatprep.subr.bf16.mxu0 0
    %91 = vmatpush1.bf16.msra.mxu0 0
    %92 = vmatprep.subr.bf16.mxu0 0
    %93 = vmatpush1.bf16.msra.mxu0 %v73
    %94 = vmatprep.subr.bf16.mxu0 0
    %95 = vmatpush1.bf16.msra.mxu0 %v72
    %96 = vmatprep.subr.bf16.mxu0 0
    %97 = vmatpush2.bf16.msra.mxu0 0
    %98 = vmatprep.subr.bf16.mxu0 0
    %99 = vmatpush2.bf16.msra.mxu0 0
    %100 = vmatprep.subr.bf16.mxu0 0
    %101 = vmatpush2.bf16.msra.mxu0 0
    %102 = vmatprep.subr.bf16.mxu0 0
    %103 = vmatpush2.bf16.msra.mxu0 0
    %104 = vmatprep.subr.bf16.mxu0 0
    %105 = vmatpush2.bf16.msra.mxu0 0
    %106 = vmatprep.subr.bf16.mxu0 0
    %107 = vmatpush2.bf16.msra.mxu0 0
    %108 = vmatprep.subr.bf16.mxu0 0
    %109 = vmatpush2.bf16.msra.mxu0 0
    %110 = vmatprep.subr.bf16.mxu0 0
    %111 = vmatpush2.bf16.msra.mxu0 0
    %112 = vmatprep.mubr.bf16.mxu0 0
    %113 = vmatmul.mubr.bf16.gmra.mxu0 %v78
    %v114 = vpop.f32.mrf.mxu0
    %v115 = vadd.f32 0.0, %v114
    %v116 = vpop.f32.mrf.mxu0
    %v117 = vpop.f32.mrf.mxu0
    %v118 = vadd.f32 0.0, %v117
    %v119 = vpop.f32.mrf.mxu0
    %120 = vdwg.mxu0
    %v121 = vadd.f32 %v51, %v115
    %v122 = vadd.f32 %v52, %v118
    %vm123 = vcmask 523264
    %124 = vst.msk [vmem:[#allocation2] sm:$0xff] %vm123, %v121
    %125 = vst.msk [vmem:[#allocation2 + $0x8] sm:$0xff] %vm123, %v122
    // Predicated region
    $region26: #{tpu_custom_call.1} parent=1 // pred_check
      %p126 = pneg %p44
    $region27: #{tpu_custom_call.1} parent=1 // pred_check_branch
      %128 = sbr.rel (%p126) target = $region29
    $region28: #{tpu_custom_call.1} parent=1 // pred_region
      %v129 = vld [vmem:[#allocation2] sm:$0xff]
      %v130 = vld [vmem:[#allocation2 + $0x8] sm:$0xff]
      %v131 = vld [vmem:[%s2] sm:$0x1]
      %v133 = vlaneseq
      %v134 = vshrl.u32 %v133, 7
      %v135 = vsub.s32 0, %v134
      %v136 = vrot.slane %v131, %v135
      %v138 = vadd.f32 %v129, %v136
      %v139 = vadd.f32 %v130, %v136
      %140 = vst.msk [vmem:[#allocation8] sm:$0xff] %vm123, %v138
      %141 = vst.msk [vmem:[#allocation8 + $0x8] sm:$0xff] %vm123, %v139
    $region29: #{tpu_custom_call.1} parent=1 // pred_fallthru
      _
    // Predicated region
    $region30: #{tpu_custom_call.1} parent=1 // pred_check
      _
    $region31: #{tpu_custom_call.1} parent=1 // pred_check_branch
      %143 = sbr.rel (0) target = $region33
    $region32: #{tpu_custom_call.1} parent=1 // pred_region
      %s145 = ssub.s32 256, 256
      %146 = vsyncadd [#allocation5], %s145
      %s147 = sshll.u32 [#allocation8], 4
      %s148 = int_to_ptr.vmem [resolvable:$true] %s147
      %153 = dma.vmem_to_hbm [thread:$0]  %s148, 256, %s3, [#allocation5], 128, 128, 8
    $region33: #{tpu_custom_call.1} parent=1 // pred_fallthru
      _
    // Predicated region
    $region34: #{tpu_custom_call.1} parent=1 // pred_check
      _
    $region35: #{tpu_custom_call.1} parent=1 // pred_check_branch
      %155 = sbr.rel (0) target = $region37
    $region36: #{tpu_custom_call.1} parent=1 // pred_region
      %156 = dma.done [#allocation5], 256
    $region37: #{tpu_custom_call.1} parent=1 // pred_fallthru
      _
    %157 = vsyncpa [#allocation4], 1
    %158 = vsyncpa [#allocation7], 1
    %159 = vsyncpa [#allocation5], 1

</llo_original>
